<compile_context>
chip_gen: v5e
topology: v5e:2x2
jax: 0.10.0
libtpu: 0.0.40
codegen_flags: <defaults>
</compile_context>

<pallas_src>
import functools

import jax
import jax.numpy as jnp
from jax import lax
from jax.experimental import pallas as pl
from jax.experimental.pallas import tpu as pltpu


def _round_up(x, m):
    return ((x + m - 1) // m) * m


def _vmem_capacity_bytes():
    """Per-TensorCore VMEM capacity; conservative (v7x-sized) fallback if unknown."""
    try:
        return int(pltpu.get_tpu_info().vmem_capacity_bytes)
    except Exception:
        return 64 << 20


def _estimate_vmem_bytes(bt, S, D, Do, itemsize, per_batch_proj):
    """Rough per-grid-step VMEM footprint."""
    x_dbuf = 2 * bt * S * D * itemsize                    # double-buffered x block
    o_dbuf = 2 * bt * S * Do * itemsize                   # double-buffered out block
    w_dbuf = 2 * (D * 3 * Do + 3 * Do) * itemsize         # W_qkv / b_qkv pipeline buffers
    rows = S if per_batch_proj else bt * S
    qkv = rows * 3 * Do * 4                               # f32 accumulate
    if itemsize != 4:
        qkv += rows * 3 * Do * itemsize                   # low-precision copy for attn matmuls
    attn_tmp = 2 * S * S * 4 + S * Do * 4                 # scores + exp + one head's f32 out
    return x_dbuf + o_dbuf + w_dbuf + qkv + attn_tmp


def _pick_batch_block(B, S, D, Do, itemsize, vmem_budget):
    """Batch elements per grid step: fill the MXU M dim, stay inside the VMEM
    budget, and keep >= 2 grid steps (v7x megacore sharding; no-op on v5e/v6e)."""
    bt = max(1, min(8, 256 // max(S, 1), B))              # ~256 rows fills v6e/v7x M (>=128 ok v5e)
    per_b = (2 * S * D + 2 * S * Do) * itemsize \
        + S * 3 * Do * (4 + (itemsize if itemsize != 4 else 0))
    fixed = 2 * (D * 3 * Do + 3 * Do) * itemsize + 2 * S * S * 4 + S * Do * 4
    if fixed + per_b < vmem_budget:
        bt = min(bt, max(1, int((vmem_budget - fixed) // per_b)))
    else:
        bt = 1
    if B >= 2:
        bt = min(bt, B // 2)                               # >= 2 grid steps for v7x's 2 TCs
    bt = max(1, bt)
    while B % bt:
        bt -= 1
    return bt


def _spatial_attention_kernel(x_ref, w_ref, b_ref, o_ref, *, heads, dh_pad, per_batch_proj):
    Bt, S, D = x_ref.shape
    Do = heads * dh_pad
    in_dtype = x_ref.dtype
    exact_recip = o_ref.dtype == jnp.float32              # static Python branch

    w = w_ref[...]                                         # (D, 3*Do), native dtype
    b = b_ref[...].astype(jnp.float32)                     # (1, 3*Do)

    def attend_one(qkv_b, out_view):
        # qkv_b: (S, 3*Do) values in in_dtype; out_view: (S, Do) ref view.
        for h in range(heads):                             # static unroll, heads small
            q0 = h * dh_pad
            k0 = Do + h * dh_pad
            v0 = 2 * Do + h * dh_pad
            qh = qkv_b[:, q0:q0 + dh_pad]                  # 128-lane-aligned slices
            kh = qkv_b[:, k0:k0 + dh_pad]
            vh = qkv_b[:, v0:v0 + dh_pad]

            # scores = qh @ kh.T  (no 1/sqrt(dh) scaling — matches the torch module).
            s = lax.dot_general(qh, kh, (((1,), (1,)), ((), ())),
                                preferred_element_type=jnp.float32)   # (S, S) f32
            m = jnp.max(s, axis=-1, keepdims=True)
            e = jnp.exp(s - m)
            denom = jnp.sum(e, axis=-1, keepdims=True)
            if exact_recip:
                p = e / denom                              # exact for f32 outputs
            else:
                p = e * pl.reciprocal(denom, approx=True)  # EUP slot, ~free next to exp
            oh = jnp.dot(p.astype(in_dtype), vh,
                         preferred_element_type=jnp.float32)          # (S, dh_pad) f32
            # Direct lane-aligned per-head store: no concat relayout, buffers die per head.
            out_view[:, h * dh_pad:(h + 1) * dh_pad] = oh.astype(o_ref.dtype)

    if not per_batch_proj:
        # Small S: fuse the QKV projection across all packed batch elements (fills MXU M).
        xf = x_ref[...].reshape(Bt * S, D)
        qkv = jnp.dot(xf, w, preferred_element_type=jnp.float32) + b
        qkv = qkv.astype(in_dtype)
        for bi in range(Bt):                               # static unroll, Bt small
            attend_one(qkv[bi * S:(bi + 1) * S, :], o_ref.at[bi])
    else:
        # Large S: S alone fills the MXU M dim; project per batch element inside a
        # bounded loop so only one element's qkv / (S,S) scores are live at a time.
        @pl.loop(0, Bt)
        def _(bi):
            xb = x_ref[bi]                                 # (S, D)
            qkv_b = jnp.dot(xb, w, preferred_element_type=jnp.float32) + b
            attend_one(qkv_b.astype(in_dtype), o_ref.at[bi])


def _pad_head_columns(w, heads, dh, dh_pad):
    """(D, heads*dh) -> (D, heads*dh_pad): each head's panel starts on a 128-lane boundary."""
    if dh_pad == dh:
        return w
    D = w.shape[0]
    w = w.reshape(D, heads, dh)
    w = jnp.pad(w, ((0, 0), (0, 0), (0, dh_pad - dh)))
    return w.reshape(D, heads * dh_pad)


def _pad_head_bias(bvec, heads, dh, dh_pad):
    if dh_pad == dh:
        return bvec
    bvec = bvec.reshape(heads, dh)
    bvec = jnp.pad(bvec, ((0, 0), (0, dh_pad - dh)))
    return bvec.reshape(heads * dh_pad)


def spatial_attention(x, wq, wk, wv, bq, bk, bv, *, heads=1):
    """x: (B, S, D); weights (D, D) stored as (D_in, D_out); biases (D,). Returns (B, S, D)."""
    B, S, D = x.shape
    assert D % heads == 0
    dh = D // heads
    # Pad each head's panel to a 128-lane multiple (zero columns -> identical math);
    # trades a little underfilled-MXU work for unmasked stores and no relayout copies.
    dh_pad = _round_up(dh, 128)
    Do = heads * dh_pad

    # Fused + head-padded QKV parameters: one (D, 3*Do) weight, one (1, 3*Do) bias.
    w_qkv = jnp.concatenate(
        [_pad_head_columns(w, heads, dh, dh_pad) for w in (wq, wk, wv)], axis=1)
    b_qkv = jnp.concatenate(
        [_pad_head_bias(v, heads, dh, dh_pad) for v in (bq, bk, bv)]).reshape(1, 3 * Do)

    itemsize = x.dtype.itemsize
    cap = _vmem_capacity_bytes()
    per_batch_proj = S >= 256                              # S alone fills the MXU M dim
    Bt = _pick_batch_block(B, S, D, Do, itemsize, vmem_budget=cap // 2)

    need = _estimate_vmem_bytes(Bt, S, D, Do, itemsize, per_batch_proj)
    vmem_limit = int(min(max(32 << 20, need * 3 // 2 + (2 << 20)), (cap * 9) // 10))

    kernel = functools.partial(_spatial_attention_kernel, heads=heads, dh_pad=dh_pad,
                               per_batch_proj=per_batch_proj)

    out = pl.pallas_call(
        kernel,
        out_shape=jax.ShapeDtypeStruct((B, S, Do), x.dtype),
        grid_spec=pltpu.PrefetchScalarGridSpec(
            num_scalar_prefetch=0,
            grid=(B // Bt,),
            in_specs=[
                pl.BlockSpec((Bt, S, D), lambda b: (b, 0, 0)),   # x (batch block)
                pl.BlockSpec((D, 3 * Do), lambda b: (0, 0)),     # fused W_qkv (DMA'd once)
                pl.BlockSpec((1, 3 * Do), lambda b: (0, 0)),     # fused b_qkv
            ],
            out_specs=pl.BlockSpec((Bt, S, Do), lambda b: (b, 0, 0)),
        ),
        compiler_params=pltpu.CompilerParams(
            dimension_semantics=("parallel",),
            vmem_limit_bytes=vmem_limit),
    )(x, w_qkv, b_qkv)

    if dh_pad != dh:
        # Strip the per-head lane padding (wrapper-side layout plumbing only).
        out = out.reshape(B, S, heads, dh_pad)[..., :dh].reshape(B, S, D)
    return out


def spatial_attention_ref(x, wq, wk, wv, bq, bk, bv, *, heads=1):
    """Pure-JAX reference mirroring the PyTorch forward."""
    B, S, D = x.shape
    dh = D // heads
    q = (x @ wq + bq).reshape(B, S, heads, dh).transpose(0, 2, 1, 3)
    k = (x @ wk + bk).reshape(B, S, heads, dh).transpose(0, 2, 1, 3)
    v = (x @ wv + bv).reshape(B, S, heads, dh).transpose(0, 2, 1, 3)
    scores = jnp.einsum('bhqd,bhkd->bhqk', q, k)   # no 1/sqrt(dh) scaling (matches torch module)
    attn = jax.nn.softmax(scores, axis=-1)
    out = jnp.einsum('bhqk,bhkd->bhqd', attn, v)
    return out.transpose(0, 2, 1, 3).reshape(B, S, D)


if __name__ == "__main__":
    root = jax.random.PRNGKey(0)

    def run_case(key, B, S, D, heads):
        kx, kq, kk, kv, kbq, kbk, kbv = jax.random.split(key, 7)
        x = jax.random.normal(kx, (B, S, D), dtype=jnp.float32)
        scale = 1.0 / jnp.sqrt(jnp.float32(D))
        wq = jax.random.uniform(kq, (D, D), jnp.float32, -scale, scale)
        wk = jax.random.uniform(kk, (D, D), jnp.float32, -scale, scale)
        wv = jax.random.uniform(kv, (D, D), jnp.float32, -scale, scale)
        bq = jax.random.uniform(kbq, (D,), jnp.float32, -scale, scale)
        bk = jax.random.uniform(kbk, (D,), jnp.float32, -scale, scale)
        bv = jax.random.uniform(kbv, (D,), jnp.float32, -scale, scale)

        out = spatial_attention(x, wq, wk, wv, bq, bk, bv, heads=heads)
        out = jax.block_until_ready(out)
        ref = spatial_attention_ref(x, wq, wk, wv, bq, bk, bv, heads=heads)
        assert out.shape == (B, S, D)
        err = jnp.max(jnp.abs(out - ref))
        assert jnp.allclose(out, ref, atol=2e-3, rtol=2e-3), (
            f"mismatch B={B} S={S} D={D} heads={heads}: max abs err {err}")

    keys = jax.random.split(root, 3)
    # Small shapes from the module spec (padded-head path, fused-batch projection path).
    run_case(keys[0], B=2, S=8, D=32, heads=1)
    run_case(keys[1], B=2, S=8, D=32, heads=2)
    # Moderate shapes: dh == 128 (no padding) + per-batch projection / pl.loop path.
    run_case(keys[2], B=2, S=256, D=256, heads=2)

    print("KERNEL_OK")
</pallas_src>

<mosaic_0001>
module attributes {stable_mosaic.version = 11 : i64} {
  func.func @_spatial_attention_kernel(%arg0: i32, %arg1: memref<1x8x32xf32, #tpu.memory_space<vmem>>, %arg2: memref<32x384xf32, #tpu.memory_space<vmem>>, %arg3: memref<1x384xf32, #tpu.memory_space<vmem>>, %arg4: memref<1x8x128xf32, #tpu.memory_space<vmem>>) attributes {dimension_semantics = [#tpu.dimension_semantics<parallel>], iteration_bounds = array<i64: 2>, scalar_prefetch = 0 : i64, scratch_operands = 0 : i64, tpu.core_type = #tpu.core_type<tc>, window_params = [{transform_indices = @transform_0, window_bounds = array<i64: 1, 8, 32>}, {pipeline_mode = #tpu.pipeline_mode<synchronous>, transform_indices = @transform_1, window_bounds = array<i64: 32, 384>}, {pipeline_mode = #tpu.pipeline_mode<synchronous>, transform_indices = @transform_2, window_bounds = array<i64: 1, 384>}, {transform_indices = @transform_3, window_bounds = array<i64: 1, 8, 128>}]} {
    %c0 = arith.constant 0 : index
    %c0_0 = arith.constant 0 : index
    %0 = vector.load %arg2[%c0, %c0_0] : memref<32x384xf32, #tpu.memory_space<vmem>>, vector<32x384xf32>
    %c0_1 = arith.constant 0 : index
    %c0_2 = arith.constant 0 : index
    %1 = vector.load %arg3[%c0_1, %c0_2] : memref<1x384xf32, #tpu.memory_space<vmem>>, vector<1x384xf32>
    %c0_3 = arith.constant 0 : index
    %c0_4 = arith.constant 0 : index
    %c0_5 = arith.constant 0 : index
    %2 = vector.load %arg1[%c0_3, %c0_4, %c0_5] : memref<1x8x32xf32, #tpu.memory_space<vmem>>, vector<1x8x32xf32>
    %3 = vector.shape_cast %2 : vector<1x8x32xf32> to vector<8x32xf32>
    %cst = arith.constant dense<0.000000e+00> : vector<8x384xf32>
    %4 = tpu.matmul %3, %0, %cst {dimension_numbers = #tpu.dot_dimension_numbers<[1], [0], [0], [1], [0, 0, 1, 1], [], []>} : vector<8x32xf32>, vector<32x384xf32>, vector<8x384xf32> -> vector<8x384xf32>
    %5 = vector.broadcast %1 : vector<1x384xf32> to vector<8x384xf32>
    %6 = arith.addf %4, %5 : vector<8x384xf32>
    %7 = vector.extract_strided_slice %6 {offsets = [0, 0], sizes = [8, 128], strides = [1, 1]} : vector<8x384xf32> to vector<8x128xf32>
    %8 = vector.extract_strided_slice %6 {offsets = [0, 128], sizes = [8, 128], strides = [1, 1]} : vector<8x384xf32> to vector<8x128xf32>
    %9 = vector.extract_strided_slice %6 {offsets = [0, 256], sizes = [8, 128], strides = [1, 1]} : vector<8x384xf32> to vector<8x128xf32>
    %cst_6 = arith.constant dense<0.000000e+00> : vector<8x8xf32>
    %10 = tpu.matmul %7, %8, %cst_6 {dimension_numbers = #tpu.dot_dimension_numbers<[1], [1], [0], [0], [0, 0, 1, 0], [], []>} : vector<8x128xf32>, vector<8x128xf32>, vector<8x8xf32> -> vector<8x8xf32>
    %cst_7 = arith.constant dense<0xFF800000> : vector<8xf32>
    %11 = vector.multi_reduction <maximumf>, %10, %cst_7 [1] : vector<8x8xf32> to vector<8xf32>
    %12 = vector.shape_cast %11 : vector<8xf32> to vector<8x1xf32>
    %13 = vector.broadcast %12 : vector<8x1xf32> to vector<8x8xf32>
    %14 = arith.subf %10, %13 : vector<8x8xf32>
    %15 = math.exp %14 : vector<8x8xf32>
    %cst_8 = arith.constant dense<0.000000e+00> : vector<8xf32>
    %16 = vector.multi_reduction <add>, %15, %cst_8 [1] : vector<8x8xf32> to vector<8xf32>
    %17 = vector.shape_cast %16 : vector<8xf32> to vector<8x1xf32>
    %18 = vector.broadcast %17 : vector<8x1xf32> to vector<8x8xf32>
    %19 = arith.divf %15, %18 : vector<8x8xf32>
    %cst_9 = arith.constant dense<0.000000e+00> : vector<8x128xf32>
    %20 = tpu.matmul %19, %9, %cst_9 {dimension_numbers = #tpu.dot_dimension_numbers<[1], [0], [0], [1], [0, 0, 1, 1], [], []>} : vector<8x8xf32>, vector<8x128xf32>, vector<8x128xf32> -> vector<8x128xf32>
    %c0_i32 = arith.constant 0 : i32
    %c0_i32_10 = arith.constant 0 : i32
    %c0_i32_11 = arith.constant 0 : i32
    %21 = tpu.memref_slice %arg4[%c0_i32, %c0_i32_10, %c0_i32_11] : memref<1x8x128xf32, #tpu.memory_space<vmem>> -> memref<1x8x128xf32, #tpu.memory_space<vmem>>
    %22 = tpu.memref_squeeze %21 : memref<1x8x128xf32, #tpu.memory_space<vmem>> -> memref<8x128xf32, #tpu.memory_space<vmem>>
    %c0_12 = arith.constant 0 : index
    %c0_13 = arith.constant 0 : index
    %23 = vector.load %22[%c0_12, %c0_13] : memref<8x128xf32, #tpu.memory_space<vmem>>, vector<8x128xf32>
    tpu.vector_store %22[%c0_12, %c0_13], %20 {strides = array<i32>} : memref<8x128xf32, #tpu.memory_space<vmem>>, vector<8x128xf32>,
    return
  }
  func.func @transform_0(%arg0: i32) -> (i32, i32, i32) {
    %c0_i32 = arith.constant 0 : i32
    %c0_i32_0 = arith.constant 0 : i32
    %c0_i32_1 = arith.constant 0 : i32
    return %arg0, %c0_i32, %c0_i32_0 : i32, i32, i32
  }
  func.func @transform_1(%arg0: i32) -> (i32, i32) {
    %c0_i32 = arith.constant 0 : i32
    %c0_i32_0 = arith.constant 0 : i32
    %c0_i32_1 = arith.constant 0 : i32
    return %c0_i32, %c0_i32_0 : i32, i32
  }
  func.func @transform_2(%arg0: i32) -> (i32, i32) {
    %c0_i32 = arith.constant 0 : i32
    %c0_i32_0 = arith.constant 0 : i32
    %c0_i32_1 = arith.constant 0 : i32
    return %c0_i32, %c0_i32_0 : i32, i32
  }
  func.func @transform_3(%arg0: i32) -> (i32, i32, i32) {
    %c0_i32 = arith.constant 0 : i32
    %c0_i32_0 = arith.constant 0 : i32
    %c0_i32_1 = arith.constant 0 : i32
    return %arg0, %c0_i32, %c0_i32_0 : i32, i32, i32
  }
}

</mosaic_0001>

<llo_original>
// kernel: tpu_custom_call.1
$region0: #{tpu_custom_call.1}
  #allocation0 [shape = 'u32[]', space=smem, size = 0x4, offset = 0x4, fixed_abs, tag = 'smem constant byte address 0x4 - core index']
  #allocation1 [shape = 'u32[72,128]{1,0:T(1,128)}', space=vmem, size = 0x9000, scoped, tag = 'internal scratch']
  %s0 = inlined_call_operand.hbm [shape: f32[2,8,32], index: 0, kind: input, shape index: {}]
  %s1 = inlined_call_operand.hbm [shape: f32[32,384], index: 1, kind: input, shape index: {}]
  %s2 = inlined_call_operand.hbm [shape: f32[1,384], index: 2, kind: input, shape index: {}]
  %s3 = inlined_call_operand.hbm [shape: f32[2,8,128], index: 3, kind: output, shape index: {}]
  %s4 = sld [smem:[#allocation0]]
  $region57: #{tpu_custom_call.1} parent=0
    _
  %s6 = ssub.s32 1, %s4
  %s7 = scalar_select 0, %s6, %s4
  $region1: #{tpu_custom_call.1} parent=0
    #allocation2 [shape = 'u8[8192]{0}', space=vmem, size = 0x2000, scoped, tag = 'input window, operand 0']
    #allocation3 [shape = 's32[2]{0}', space=sflag, size = 0x8, scoped, tag = 'scoped memory for tpu_custom_call.1']
    #allocation4 [shape = 's32[2]{0}', space=sflag, size = 0x8, scoped, tag = 'scoped memory for tpu_custom_call.1']
    #allocation5 [shape = 'u8[49152]{0}', space=vmem, size = 0xc000, scoped, tag = 'input window, operand 1, single buffered']
    #allocation6 [shape = 's32[1]{0}', space=sflag, size = 0x4, scoped, tag = 'scoped memory for tpu_custom_call.1']
    #allocation7 [shape = 'u8[1536]{0}', space=vmem, size = 0x800, scoped, tag = 'input window, operand 2, single buffered']
    #allocation8 [shape = 'u8[8192]{0}', space=vmem, size = 0x2000, scoped, tag = 'output window, operand 0']
    %8 = vsyncpa [#allocation3], 0
    %s9 = scalar_lea.sflag [#allocation3], 1
    %10 = vsyncpa %s9, 0
    %11 = vsyncpa [#allocation6], 0
    %12 = vsyncpa [#allocation4], 0
    %s13 = scalar_lea.sflag [#allocation4], 1
    %14 = vsyncpa %s13, 0
    loop: start=0, step=1, limit=4
    $region2: #{tpu_custom_call.1} parent=1 // loop_pre_header
      _
    $region3: #{tpu_custom_call.1} parent=1 // loop_header
      %s16 = sphi 0, %s20
      %p17 = scmp.ge.s32.totalorder %s16, 4
      %s26 = sphi 0, %s28
      %s29 = sphi 0, %s26
      %s30 = sphi 0, %s29
      %s46 = sphi 0, %s30
      %s50 = sphi 0, %s50
      %s52 = sphi 0, %s50
      %s53 = sphi 0, %s52
      %s67 = sphi 0, %s53
      %s71 = sphi 0, %s71
      %s73 = sphi 0, %s71
      %s74 = sphi 0, %s73
      %s88 = sphi 0, %s74
      %s94 = sphi 0, %s96
      %s97 = sphi 0, %s94
      %s98 = sphi 0, %s97
      %s114 = sphi 0, %s98
    $region4: #{tpu_custom_call.1} parent=1 // loop_header_branch
      %19 = sbr.rel (%p17) target = $region8
    $region5: #{tpu_custom_call.1} parent=1 // loop_body
      %s21 = ssub.s32 %s16, 1
      %s22 = ssub.s32 %s16, 2
      %s23 = sadd.s32 %s16, 1
      %s24 = ssub.s32 %s16, %s23
      %p25 = scmp.eq.s32.totalorder %s24, 0
      %s27 = sadd.s32 %s26, 1
      %s28 = scalar_select %p25, %s26, %s27
      %p31 = pneg %p25
      %p32 = scmp.eq.s32.totalorder %s16, 1
      %p33 = por %p31, %p32
      %p34 = scmp.ne.s32.totalorder %s26, %s29
      %p35 = scmp.eq.s32.totalorder %s16, 0
      %p36 = por %p34, %p35
      %p37 = scmp.ne.s32.totalorder %s26, %s29
      %p38 = scmp.eq.s32.totalorder %s21, 1
      %p39 = por %p37, %p38
      %p40 = scmp.ne.s32.totalorder %s29, %s30
      %p41 = scmp.eq.s32.totalorder %s21, 0
      %p42 = por %p40, %p41
      %p43 = scmp.ne.s32.totalorder %s29, %s30
      %p44 = scmp.eq.s32.totalorder %s22, 1
      %p45 = por %p43, %p44
      %p47 = scmp.ne.s32.totalorder %s30, %s46
      %p48 = scmp.eq.s32.totalorder %s22, 0
      %p49 = por %p47, %p48
      %s51 = sadd.s32 %s50, 1
      %p54 = scmp.eq.s32.totalorder %s16, 1
      %p55 = scmp.ne.s32.totalorder %s50, %s52
      %p56 = scmp.eq.s32.totalorder %s16, 0
      %p57 = por %p55, %p56
      %p58 = scmp.ne.s32.totalorder %s50, %s52
      %p59 = scmp.eq.s32.totalorder %s21, 1
      %p60 = por %p58, %p59
      %p61 = scmp.ne.s32.totalorder %s52, %s53
      %p62 = scmp.eq.s32.totalorder %s21, 0
      %p63 = por %p61, %p62
      %p64 = scmp.ne.s32.totalorder %s52, %s53
      %p65 = scmp.eq.s32.totalorder %s22, 1
      %p66 = por %p64, %p65
      %p68 = scmp.ne.s32.totalorder %s53, %s67
      %p69 = scmp.eq.s32.totalorder %s22, 0
      %p70 = por %p68, %p69
      %s72 = sadd.s32 %s71, 1
      %p75 = scmp.eq.s32.totalorder %s16, 1
      %p76 = scmp.ne.s32.totalorder %s71, %s73
      %p77 = scmp.eq.s32.totalorder %s16, 0
      %p78 = por %p76, %p77
      %p79 = scmp.ne.s32.totalorder %s71, %s73
      %p80 = scmp.eq.s32.totalorder %s21, 1
      %p81 = por %p79, %p80
      %p82 = scmp.ne.s32.totalorder %s73, %s74
      %p83 = scmp.eq.s32.totalorder %s21, 0
      %p84 = por %p82, %p83
      %p85 = scmp.ne.s32.totalorder %s73, %s74
      %p86 = scmp.eq.s32.totalorder %s22, 1
      %p87 = por %p85, %p86
      %p89 = scmp.ne.s32.totalorder %s74, %s88
      %p90 = scmp.eq.s32.totalorder %s22, 0
      %p91 = por %p89, %p90
      %s92 = ssub.s32 %s16, %s23
      %p93 = scmp.eq.s32.totalorder %s92, 0
      %s95 = sadd.s32 %s94, 1
      %s96 = scalar_select %p93, %s94, %s95
      %p99 = pneg %p93
      %p100 = scmp.eq.s32.totalorder %s16, 1
      %p101 = por %p99, %p100
      %p102 = scmp.ne.s32.totalorder %s94, %s97
      %p103 = scmp.eq.s32.totalorder %s16, 0
      %p104 = por %p102, %p103
      %p105 = scmp.ne.s32.totalorder %s94, %s97
      %p106 = scmp.eq.s32.totalorder %s21, 1
      %p107 = por %p105, %p106
      %p108 = scmp.ne.s32.totalorder %s97, %s98
      %p109 = scmp.eq.s32.totalorder %s21, 0
      %p110 = por %p108, %p109
      %p111 = scmp.ne.s32.totalorder %s97, %s98
      %p112 = scmp.eq.s32.totalorder %s22, 1
      %p113 = por %p111, %p112
      %p115 = scmp.ne.s32.totalorder %s98, %s114
      %p116 = scmp.eq.s32.totalorder %s22, 0
      %p117 = por %p115, %p116
      %p118 = scmp.le.s32.totalorder 1, %s16
      %p119 = scmp.lt.s32.totalorder %s16, 3
      %p120 = pnand %p118, %p119
      %p121 = pneg %p120
      // Predicated region
      $region9: #{tpu_custom_call.1} parent=5 // pred_check
        _
      $region10: #{tpu_custom_call.1} parent=5 // pred_check_branch
        %123 = sbr.rel (%p120) target = $region12
      $region11: #{tpu_custom_call.1} parent=5 // pred_region
        %s124 = ssub.s32 %s16, 1
        // Predicated region
        $region13: #{tpu_custom_call.1} parent=11 // pred_check
          %p125 = pneg %p63
        $region14: #{tpu_custom_call.1} parent=11 // pred_check_branch
          %127 = sbr.rel (%p125) target = $region16
        $region15: #{tpu_custom_call.1} parent=11 // pred_region
          %129 = vsyncadd [#allocation6], 0
          %s130 = sshll.u32 %s1, 4
          %s131 = int_to_ptr.hbm [resolvable:$true] %s130
          %s132 = sshll.u32 [#allocation5], 4
          %s133 = int_to_ptr.vmem [resolvable:$true] %s132
          %138 = dma.hbm_to_vmem [thread:$0]  %s131, 1536, %s133, [#allocation6], 384, 384, 24
        $region16: #{tpu_custom_call.1} parent=11 // pred_fallthru
          _
        // Predicated region
        $region17: #{tpu_custom_call.1} parent=11 // pred_check
          %p139 = pneg %p84
        $region18: #{tpu_custom_call.1} parent=11 // pred_check_branch
          %141 = sbr.rel (%p139) target = $region20
        $region19: #{tpu_custom_call.1} parent=11 // pred_region
          %143 = vsyncadd [#allocation6], 0
          %s145 = sshll.u32 %s2, 4
          %s146 = int_to_ptr.hbm [resolvable:$true] %s145
          %s147 = sshll.u32 [#allocation7], 4
          %s148 = int_to_ptr.vmem [resolvable:$true] %s147
          %150 = dma.hbm_to_vmem [thread:$0]  %s146, 48, %s148, [#allocation6]
        $region20: #{tpu_custom_call.1} parent=11 // pred_fallthru
          _
      $region12: #{tpu_custom_call.1} parent=5 // pred_fallthru
        _
      %p151 = scmp.lt.s32.totalorder %s16, 2
      // Predicated region
      $region21: #{tpu_custom_call.1} parent=5 // pred_check
        %p152 = pneg %p151
      $region22: #{tpu_custom_call.1} parent=5 // pred_check_branch
        %154 = sbr.rel (%p152) target = $region24
      $region23: #{tpu_custom_call.1} parent=5 // pred_region
        // Predicated region
        $region25: #{tpu_custom_call.1} parent=23 // pred_check
          %p155 = pneg %p36
        $region26: #{tpu_custom_call.1} parent=23 // pred_check_branch
          %157 = sbr.rel (%p155) target = $region28
        $region27: #{tpu_custom_call.1} parent=23 // pred_region
          %s158 = sand.u32 %s26, 1
          %s159 = scalar_lea.sflag [#allocation3], %s158
          %s160 = sand.u32 %s26, 1
          %s161 = smul.addr %s160, 8
          %s162 = scalar_lea.vmem [#allocation2], %s161
          %164 = vsyncadd %s159, 0
          %s165 = smul.addr %s16, 8
          %s166 = scalar_lea.hbm %s0, %s165
          %s168 = sshll.u32 %s166, 4
          %s169 = int_to_ptr.hbm [resolvable:$true] %s168
          %s170 = sshll.u32 %s162, 4
          %s171 = int_to_ptr.vmem [resolvable:$true] %s170
          %173 = dma.hbm_to_vmem [thread:$0]  %s169, 128, %s171, %s159
        $region28: #{tpu_custom_call.1} parent=23 // pred_fallthru
          _
      $region24: #{tpu_custom_call.1} parent=5 // pred_fallthru
        _
      %p174 = scmp.le.s32.totalorder 1, %s16
      %p175 = scmp.lt.s32.totalorder %s16, 3
      %p176 = pnand %p174, %p175
      %p177 = pneg %p176
      // Predicated region
      $region29: #{tpu_custom_call.1} parent=5 // pred_check
        _
      $region30: #{tpu_custom_call.1} parent=5 // pred_check_branch
        %179 = sbr.rel (%p176) target = $region32
      $region31: #{tpu_custom_call.1} parent=5 // pred_region
        %s180 = ssub.s32 %s16, 1
        %s181 = sand.u32 %s29, 1
        %s182 = scalar_lea.sflag [#allocation3], %s181
        %s183 = sand.u32 %s29, 1
        %s184 = smul.addr %s183, 8
        %s185 = scalar_lea.vmem [#allocation2], %s184
        // Predicated region
        $region33: #{tpu_custom_call.1} parent=31 // pred_check
          %p186 = pneg %p42
        $region34: #{tpu_custom_call.1} parent=31 // pred_check_branch
          %188 = sbr.rel (%p186) target = $region36
        $region35: #{tpu_custom_call.1} parent=31 // pred_region
          %190 = dma.done %s182, 128
        $region36: #{tpu_custom_call.1} parent=31 // pred_fallthru
          _
        // Predicated region
        $region37: #{tpu_custom_call.1} parent=31 // pred_check
          %p191 = pneg %p63
        $region38: #{tpu_custom_call.1} parent=31 // pred_check_branch
          %193 = sbr.rel (%p191) target = $region40
        $region39: #{tpu_custom_call.1} parent=31 // pred_region
          %195 = dma.done [#allocation6], 1536
        $region40: #{tpu_custom_call.1} parent=31 // pred_fallthru
          _
        // Predicated region
        $region41: #{tpu_custom_call.1} parent=31 // pred_check
          %p196 = pneg %p84
        $region42: #{tpu_custom_call.1} parent=31 // pred_check_branch
          %198 = sbr.rel (%p196) target = $region44
        $region43: #{tpu_custom_call.1} parent=31 // pred_region
          %200 = dma.done [#allocation6], 48
        $region44: #{tpu_custom_call.1} parent=31 // pred_fallthru
          _
        %s201 = sand.u32 %s29, 1
        %s202 = scalar_lea.sflag [#allocation3], %s201
        %s203 = sand.u32 %s29, 1
        %s204 = smul.addr %s203, 8
        %s205 = scalar_lea.vmem [#allocation2], %s204
        %p206 = pneg %p42
        %p207 = pneg %p39
        %p208 = pneg %p63
        %p209 = pneg %p60
        %p210 = pneg %p84
        %p211 = pneg %p81
        %p212 = pneg %p110
        %p213 = pneg %p107
        %s214 = sand.u32 %s97, 1
        %s215 = scalar_lea.sflag [#allocation4], %s214
        %s216 = sand.u32 %s97, 1
        %s217 = smul.addr %s216, 8
        %s218 = scalar_lea.vmem [#allocation8], %s217
        %v219 = vld [vmem:[#allocation5] sm:$0xff]
        %v220 = vld [vmem:[#allocation5 + $0x8] sm:$0xff]
        %v221 = vld [vmem:[#allocation5 + $0x10] sm:$0xff]
        %v222 = vld [vmem:[#allocation5 + $0x18] sm:$0xff]
        %v223 = vld [vmem:[#allocation5 + $0x20] sm:$0xff]
        %v224 = vld [vmem:[#allocation5 + $0x28] sm:$0xff]
        %v225 = vld [vmem:[#allocation5 + $0x30] sm:$0xff]
        %v226 = vld [vmem:[#allocation5 + $0x38] sm:$0xff]
        %v227 = vld [vmem:[#allocation5 + $0x40] sm:$0xff]
        %v228 = vld [vmem:[#allocation5 + $0x48] sm:$0xff]
        %v229 = vld [vmem:[#allocation5 + $0x50] sm:$0xff]
        %v230 = vld [vmem:[#allocation5 + $0x58] sm:$0xff]
        %v231 = vld [vmem:[#allocation7] sm:$0x7]
        %v232 = vld [vmem:[%s185] sm:$0xff]
        %v234 = vperm.slane %v231, 0
        %v235 = vperm.slane %v231, 1
        %v236 = vperm.slane %v231, 2
        %vm240 = vcmask 261120
        %v242 = vsel %vm240, %v232, 0
        %244 = vmatpush.msra.mxu0 0.0
        %245 = vmatpush.msra.mxu0 0.0
        %246 = vmatpush.msra.mxu0 0.0
        %247 = vmatpush.msra.mxu0 0.0
        %248 = vmatpush.msra.mxu0 0.0
        %249 = vmatpush.msra.mxu0 0.0
        %250 = vmatpush.msra.mxu0 0.0
        %251 = vmatpush.msra.mxu0 0.0
        %252 = vmatpush.msra.mxu0 0.0
        %253 = vmatpush.msra.mxu0 0.0
        %254 = vmatpush.msra.mxu0 0.0
        %255 = vmatpush.msra.mxu0 0.0
        %256 = vmatpush.msra.mxu0 %v228
        %257 = vmatpush.msra.mxu0 %v225
        %258 = vmatpush.msra.mxu0 %v222
        %259 = vmatpush.msra.mxu0 %v219
        %260 = vmatmul.f32.gmra.mxu0 %v242
        %v261 = vpop.f32.mrf.mxu0
        %v262 = vadd.f32 %v234, %v261
        %263 = vdwg.mxu0
        %264 = vmatpush.msra.mxu0 0.0
        %265 = vmatpush.msra.mxu0 0.0
        %266 = vmatpush.msra.mxu0 0.0
        %267 = vmatpush.msra.mxu0 0.0
        %268 = vmatpush.msra.mxu0 0.0
        %269 = vmatpush.msra.mxu0 0.0
        %270 = vmatpush.msra.mxu0 0.0
        %271 = vmatpush.msra.mxu0 0.0
        %272 = vmatpush.msra.mxu0 0.0
        %273 = vmatpush.msra.mxu0 0.0
        %274 = vmatpush.msra.mxu0 0.0
        %275 = vmatpush.msra.mxu0 0.0
        %276 = vmatpush.msra.mxu0 %v229
        %277 = vmatpush.msra.mxu0 %v226
        %278 = vmatpush.msra.mxu0 %v223
        %279 = vmatpush.msra.mxu0 %v220
        %280 = vmatmul.f32.gmra.mxu0 %v242
        %v281 = vpop.f32.mrf.mxu0
        %v282 = vadd.f32 %v235, %v281
        %283 = vdwg.mxu0
        %284 = vmatpush.msra.mxu0 0.0
        %285 = vmatpush.msra.mxu0 0.0
        %286 = vmatpush.msra.mxu0 0.0
        %287 = vmatpush.msra.mxu0 0.0
        %288 = vmatpush.msra.mxu0 0.0
        %289 = vmatpush.msra.mxu0 0.0
        %290 = vmatpush.msra.mxu0 0.0
        %291 = vmatpush.msra.mxu0 0.0
        %292 = vmatpush.msra.mxu0 0.0
        %293 = vmatpush.msra.mxu0 0.0
        %294 = vmatpush.msra.mxu0 0.0
        %295 = vmatpush.msra.mxu0 0.0
        %296 = vmatpush.msra.mxu0 %v230
        %297 = vmatpush.msra.mxu0 %v227
        %298 = vmatpush.msra.mxu0 %v224
        %299 = vmatpush.msra.mxu0 %v221
        %300 = vmatmul.f32.gmra.mxu0 %v242
        %v301 = vpop.f32.mrf.mxu0
        %v302 = vadd.f32 %v236, %v301
        %303 = vdwg.mxu0
        %304 = vmatpush.xpose.msra.mxu0 0.0
        %305 = vmatpush.xpose.msra.mxu0 0.0
        %306 = vmatpush.xpose.msra.mxu0 0.0
        %307 = vmatpush.xpose.msra.mxu0 0.0
        %308 = vmatpush.xpose.msra.mxu0 0.0
        %309 = vmatpush.xpose.msra.mxu0 0.0
        %310 = vmatpush.xpose.msra.mxu0 0.0
        %311 = vmatpush.xpose.msra.mxu0 0.0
        %312 = vmatpush.xpose.msra.mxu0 0.0
        %313 = vmatpush.xpose.msra.mxu0 0.0
        %314 = vmatpush.xpose.msra.mxu0 0.0
        %315 = vmatpush.xpose.msra.mxu0 0.0
        %316 = vmatpush.xpose.msra.mxu0 0.0
        %317 = vmatpush.xpose.msra.mxu0 0.0
        %318 = vmatpush.xpose.msra.mxu0 0.0
        %319 = vmatpush.xpose.msra.mxu0 %v282
        %320 = vmatmul.f32.gmra.mxu0 %v262
        %v321 = vpop.f32.mrf.mxu0
        %v322 = vadd.f32 0.0, %v321
        %323 = vdwg.mxu0
        %vm324 = vcmask 64512
        %v325 = vsel %vm324, %v322, -inf
        %326 = vmax.xlane.f32.xlu0 %v325
        %v327 = vpop.xlane.xlu0 %326
        %v328 = vsub.f32 %v322, %v327
        %v329 = vmul.f32 %v328, 1.442695
        %v330 = vpow.pop %v329
        %v331 = vsel %vm324, %v330, 0.0
        %332 = vadd.xlane.f32.xlu0 %v331
        %v333 = vpop.xlane.xlu0 %332
        %v334 = vrcp.pop %v333
        %v335 = vmul.f32 %v333, %v334
        %v336 = vsub.f32 1.0, %v335
        %v337 = vmul.f32 %v334, %v336
        %v338 = vadd.f32 %v334, %v337
        %vm339 = vweird.f32 %v333
        %vm340 = vweird.f32 %v334
        %vm341 = vmor %vm339, %vm340
        %v342 = vsel %vm341, %v334, %v338
        %v343 = vand.u32 2147483647, %v333
        %vm344 = vcmp.eq.f32.partialorder %v343, 8.507059e+37
        %v345 = vand.u32 %v333, 2147483648
        %v346 = vor.u32 1.1754944e-38, %v345
        %v347 = vsel %vm344, %v346, %v342
        %v348 = vmul.f32 %v330, %v347
        %v350 = vsel %vm324, %v348, 0
        %352 = vmatpush.msra.mxu0 0.0
        %353 = vmatpush.msra.mxu0 0.0
        %354 = vmatpush.msra.mxu0 0.0
        %355 = vmatpush.msra.mxu0 0.0
        %356 = vmatpush.msra.mxu0 0.0
        %357 = vmatpush.msra.mxu0 0.0
        %358 = vmatpush.msra.mxu0 0.0
        %359 = vmatpush.msra.mxu0 0.0
        %360 = vmatpush.msra.mxu0 0.0
        %361 = vmatpush.msra.mxu0 0.0
        %362 = vmatpush.msra.mxu0 0.0
        %363 = vmatpush.msra.mxu0 0.0
        %364 = vmatpush.msra.mxu0 0.0
        %365 = vmatpush.msra.mxu0 0.0
        %366 = vmatpush.msra.mxu0 0.0
        %367 = vmatpush.msra.mxu0 %v302
        %368 = vmatmul.f32.gmra.mxu0 %v350
        %v369 = vpop.f32.mrf.mxu0
        %v370 = vadd.f32 0.0, %v369
        %371 = vdwg.mxu0
        %372 = vst [vmem:[%s218] sm:$0xff] %v370
        %s373 = sand.u32 %s97, 1
        %s374 = scalar_lea.sflag [#allocation4], %s373
        %s375 = sand.u32 %s97, 1
        %s376 = smul.addr %s375, 8
        %s377 = scalar_lea.vmem [#allocation8], %s376
        // Predicated region
        $region45: #{tpu_custom_call.1} parent=31 // pred_check
          %p378 = pneg %p107
        $region46: #{tpu_custom_call.1} parent=31 // pred_check_branch
          %380 = sbr.rel (%p378) target = $region48
        $region47: #{tpu_custom_call.1} parent=31 // pred_region
          %382 = vsyncadd %s374, 0
          %s383 = smul.addr %s21, 8
          %s384 = scalar_lea.hbm %s3, %s383
          %s386 = sshll.u32 %s377, 4
          %s387 = int_to_ptr.vmem [resolvable:$true] %s386
          %s388 = sshll.u32 %s384, 4
          %s389 = int_to_ptr.hbm [resolvable:$true] %s388
          %391 = dma.vmem_to_hbm [thread:$0]  %s387, 128, %s389, %s374
        $region48: #{tpu_custom_call.1} parent=31 // pred_fallthru
          _
      $region32: #{tpu_custom_call.1} parent=5 // pred_fallthru
        _
      %p392 = scmp.le.s32.totalorder 2, %s16
      // Predicated region
      $region49: #{tpu_custom_call.1} parent=5 // pred_check
        %p393 = pneg %p392
      $region50: #{tpu_custom_call.1} parent=5 // pred_check_branch
        %395 = sbr.rel (%p393) target = $region52
      $region51: #{tpu_custom_call.1} parent=5 // pred_region
        %s396 = ssub.s32 %s16, 2
        // Predicated region
        $region53: #{tpu_custom_call.1} parent=51 // pred_check
          %p397 = pneg %p113
        $region54: #{tpu_custom_call.1} parent=51 // pred_check_branch
          %399 = sbr.rel (%p397) target = $region56
        $region55: #{tpu_custom_call.1} parent=51 // pred_region
          %s400 = sand.u32 %s98, 1
          %s401 = scalar_lea.sflag [#allocation4], %s400
          %s402 = sand.u32 %s98, 1
          %s403 = smul.addr %s402, 8
          %s404 = scalar_lea.vmem [#allocation8], %s403
          %406 = dma.done %s401, 128
        $region56: #{tpu_custom_call.1} parent=51 // pred_fallthru
          _
      $region52: #{tpu_custom_call.1} parent=5 // pred_fallthru
        _
    $region6: #{tpu_custom_call.1} parent=1 // loop_footer
      %s20 = sadd.s32 1, %s16
    $region7: #{tpu_custom_call.1} parent=1 // loop_footer_branch
      %15 = sbr.rel target = $region3
    $region8: #{tpu_custom_call.1} parent=1 // loop_exit
      _
    %407 = vsyncpa [#allocation3], 1
    %s408 = scalar_lea.sflag [#allocation3], 1
    %409 = vsyncpa %s408, 1
    %410 = vsyncpa [#allocation6], 1
    %411 = vsyncpa [#allocation4], 1
    %s412 = scalar_lea.sflag [#allocation4], 1
    %413 = vsyncpa %s412, 1

</llo_original>
